<compile_context>
chip_gen: v5e
topology: v5e:2x2
jax: 0.10.0
libtpu: 0.0.40
codegen_flags: <defaults>
</compile_context>

<pallas_src>
import functools

import jax
import jax.numpy as jnp
from jax.experimental import pallas as pl
from jax.experimental.pallas import tpu as pltpu


def _channel_block(c, target=32):
    """Output-channel block: multiple of 8 that divides c, <= target, and gives
    >= 2 grid steps when c >= 16 (so the 'parallel' axis can use both v7x TCs)."""
    if c < 16 or c % 8 != 0:
        return c
    blk = max(8, (min(target, c // 2) // 8) * 8)
    while blk > 8 and c % blk != 0:
        blk -= 8
    return blk


def _vmem_limit(block_bytes):
    # double-buffered blocks + headroom, clamped so it is legal on every chip
    # (v7x has 64 MiB of VMEM per TensorCore).
    return int(min(64 * 1024 * 1024,
                   max(16 * 1024 * 1024, 2 * block_bytes + (2 << 20))))


# ----------------------------------------------------------------------------
# Kernel 1: complex spectral channel mix (both +/- mode blocks), lane-dense.
#   xr/xi : [Ci, B, 1, m1p]      single temporal frequency (not pre-broadcast)
#   wr/wi : [Ci, P_blk, m1p]     P_blk = co_blk * 2 * m0  (channel-major)
#   out   : [B, P_blk, m1p]
# The Ci contraction is an unrolled loop with two small accumulators; the
# broadcast over B (outer) and over P_blk (sublane) happens inside the multiply.
# ----------------------------------------------------------------------------
def spectral_mix_kernel(xr_ref, xi_ref, wr_ref, wi_ref, or_ref, oi_ref):
    ci = xr_ref.shape[0]
    xr0, xi0 = xr_ref[0], xi_ref[0]          # [B, 1, m1p]
    wr0, wi0 = wr_ref[0], wi_ref[0]          # [P_blk, m1p]
    acc_r = xr0 * wr0 - xi0 * wi0            # [B, P_blk, m1p]
    acc_i = xr0 * wi0 + xi0 * wr0
    for i in range(1, ci):                   # Ci is static & small: unrolled
        xr_i, xi_i = xr_ref[i], xi_ref[i]
        wr_i, wi_i = wr_ref[i], wi_ref[i]
        acc_r = acc_r + xr_i * wr_i - xi_i * wi_i
        acc_i = acc_i + xr_i * wi_i + xi_i * wr_i
    or_ref[...] = acc_r
    oi_ref[...] = acc_i


# ----------------------------------------------------------------------------
# Kernel 2: fused 1x1 linear (MXU) + residual + BatchNorm2d(train) + ReLU.
#   x  : [Ci_pad, N]   N = B*H*W, lane-dense (bf16 or f32)
#   x1 : [co_blk, N]   spectral-branch output (f32)
#   w  : [co_blk, Ci_pad]
#   gb : [co_blk, 2]   packed (gamma, beta)
#   out: [co_blk, N]   f32
# The Linear bias is NOT applied: with training-mode BatchNorm it is exactly
# cancelled by the mean subtraction.
# ----------------------------------------------------------------------------
def local_linear_bn_relu_kernel(x_ref, x1_ref, w_ref, gb_ref, o_ref, *,
                                eps, inv_n):
    x2 = jnp.dot(w_ref[...], x_ref[...], preferred_element_type=jnp.float32)
    s = x1_ref[...] + x2
    # biased batch stats over (B,H,W) == lane axis, batched over channels;
    # two-pass mean-then-var to avoid cancellation.
    mean = jnp.sum(s, axis=-1, keepdims=True) * inv_n
    d = s - mean
    var = jnp.sum(d * d, axis=-1, keepdims=True) * inv_n
    gb = gb_ref[...]
    y = d * jax.lax.rsqrt(var + eps) * gb[:, 0:1] + gb[:, 1:2]
    o_ref[...] = jnp.maximum(y, 0.0)


# ----------------------------------------------------------------------------
# Wrapper: FNOBlock1p1d.forward (bn=True / training-mode BatchNorm, ReLU)
# ----------------------------------------------------------------------------
def fno_block_1p1d(x, wp, wn, w_lin, b_lin, gamma, beta, modes, pad=0,
                   eps=1e-5, local_dtype=jnp.bfloat16):
    B, Ci, H, W = x.shape
    m0, m1 = modes
    Co = wp.shape[1]
    Hout, Wpad = H + pad, W + pad
    Wf = Wpad // 2 + 1
    assert m0 <= Hout and m1 <= Wf, "modes exceed padded spectrum size"

    m1p = ((m1 + 127) // 128) * 128          # lane-dense mode axis
    co_blk = _channel_block(Co)
    n_blk = Co // co_blk
    P, P_blk = 2 * m0 * Co, 2 * m0 * co_blk  # (Co, 2, m0) flattened, channel-major

    # ---- spectral branch ----------------------------------------------------
    # TODO(synk): rfft2 / irfft2 have no Pallas equivalent; they stay in XLA.
    x0 = x[:, :, 0:1, :]
    xq = jnp.fft.rfft2(x0, s=(1, Wpad), axes=(-2, -1))[:, :, 0, :m1]   # [B,Ci,m1]
    xq = jnp.transpose(xq, (1, 0, 2))[:, :, None, :]                    # [Ci,B,1,m1]
    xr = jnp.pad(jnp.real(xq).astype(jnp.float32),
                 ((0, 0), (0, 0), (0, 0), (0, m1p - m1)))
    xi = jnp.pad(jnp.imag(xq).astype(jnp.float32),
                 ((0, 0), (0, 0), (0, 0), (0, m1p - m1)))
    # weights [Ci,Co,m0,m1] x2 -> [Ci, Co*2*m0, m1p]; padded columns are zero
    # so padded modes contribute nothing (cropped after the kernel anyway).
    w_all = jnp.stack([wp, wn], axis=2).reshape(Ci, P, m1)
    w_all = jnp.pad(w_all, ((0, 0), (0, 0), (0, m1p - m1)))
    wr = jnp.real(w_all).astype(jnp.float32)
    wi = jnp.imag(w_all).astype(jnp.float32)

    spec_block_bytes = 4 * (2 * Ci * B * m1p + 2 * Ci * P_blk * m1p
                            + 2 * B * P_blk * m1p)
    spec_re, spec_im = pl.pallas_call(
        spectral_mix_kernel,
        out_shape=(jax.ShapeDtypeStruct((B, P, m1p), jnp.float32),
                   jax.ShapeDtypeStruct((B, P, m1p), jnp.float32)),
        grid=(n_blk,),
        in_specs=[
            pl.BlockSpec((Ci, B, 1, m1p), lambda c: (0, 0, 0, 0)),
            pl.BlockSpec((Ci, B, 1, m1p), lambda c: (0, 0, 0, 0)),
            pl.BlockSpec((Ci, P_blk, m1p), lambda c: (0, c, 0)),
            pl.BlockSpec((Ci, P_blk, m1p), lambda c: (0, c, 0)),
        ],
        out_specs=(pl.BlockSpec((B, P_blk, m1p), lambda c: (0, c, 0)),
                   pl.BlockSpec((B, P_blk, m1p), lambda c: (0, c, 0))),
        compiler_params=pltpu.CompilerParams(
            dimension_semantics=("parallel",),
            vmem_limit_bytes=_vmem_limit(spec_block_bytes)),
    )(xr, xi, wr, wi)

    # mode placement + zero spectrum + inverse FFT stay in plain JAX/XLA
    spec = (spec_re[..., :m1] + 1j * spec_im[..., :m1]).astype(jnp.complex64)
    spec = spec.reshape(B, Co, 2, m0, m1)
    x_spec = jnp.zeros((B, Co, Hout, Wf), jnp.complex64)
    x_spec = x_spec.at[:, :, :m0, :m1].set(spec[:, :, 0])           # + modes
    x_spec = x_spec.at[:, :, Hout - m0:, :m1].set(spec[:, :, 1])    # - modes
    x1 = jnp.fft.irfft2(x_spec, s=(Hout, Wpad), axes=(-2, -1))
    if pad > 0:
        x1 = x1[:, :, :-pad, :-pad]
    x1 = x1.astype(jnp.float32)

    # ---- local branch + BN(train) + ReLU (fused, lane-dense [C, B*H*W]) -----
    # NOTE: b_lin is intentionally not used -- a per-channel constant added
    # before training-mode BatchNorm is removed exactly by the mean
    # subtraction (this block has bn=True), so the add is a no-op.
    del b_lin
    N = B * H * W
    x_flat = jnp.transpose(x, (1, 0, 2, 3)).reshape(Ci, N)
    x1_flat = jnp.transpose(x1, (1, 0, 2, 3)).reshape(Co, N).astype(jnp.float32)
    w_mat = w_lin
    ci_pad = ((Ci + 7) // 8) * 8             # pad contraction dim to sublane mult
    if ci_pad != Ci:
        x_flat = jnp.pad(x_flat, ((0, ci_pad - Ci), (0, 0)))
        w_mat = jnp.pad(w_mat, ((0, 0), (0, ci_pad - Ci)))
    x_flat = x_flat.astype(local_dtype)      # HBM-bound kernel: bf16 reads
    w_mat = w_mat.astype(local_dtype)
    gb = jnp.stack([gamma, beta], axis=1).astype(jnp.float32)        # [Co, 2]

    itm = jnp.dtype(local_dtype).itemsize
    loc_block_bytes = (ci_pad * N * itm + co_blk * ci_pad * itm
                       + 2 * co_blk * N * 4 + co_blk * 2 * 4)
    y_flat = pl.pallas_call(
        functools.partial(local_linear_bn_relu_kernel, eps=eps,
                          inv_n=1.0 / float(N)),
        out_shape=jax.ShapeDtypeStruct((Co, N), jnp.float32),
        grid=(n_blk,),
        in_specs=[
            pl.BlockSpec((ci_pad, N), lambda c: (0, 0)),        # x (shared slab)
            pl.BlockSpec((co_blk, N), lambda c: (c, 0)),        # x1
            pl.BlockSpec((co_blk, ci_pad), lambda c: (c, 0)),   # weights
            pl.BlockSpec((co_blk, 2), lambda c: (c, 0)),        # (gamma, beta)
        ],
        out_specs=pl.BlockSpec((co_blk, N), lambda c: (c, 0)),
        compiler_params=pltpu.CompilerParams(
            dimension_semantics=("parallel",),
            vmem_limit_bytes=_vmem_limit(loc_block_bytes)),
    )(x_flat, x1_flat, w_mat, gb)

    return y_flat.reshape(Co, B, H, W).transpose(1, 0, 2, 3)


# ----------------------------------------------------------------------------
# Pure-JAX reference (mirrors the PyTorch forward exactly, bias included)
# ----------------------------------------------------------------------------
def reference(x, wp, wn, w_lin, b_lin, gamma, beta, modes, pad=0, eps=1e-5):
    B, Ci, H, W = x.shape
    m0, m1 = modes
    Co = wp.shape[1]
    Hout, Wpad = H + pad, W + pad
    Wf = Wpad // 2 + 1
    hi = jax.lax.Precision.HIGHEST
    x0 = x[:, :, 0:1, :]
    xq = jnp.fft.rfft2(x0, s=(1, Wpad), axes=(-2, -1))     # [B,Ci,1,Wf]
    # t was cropped to 1, so both mode blocks use the single temporal frequency
    pos = jnp.einsum('biw,iohw->bohw', xq[:, :, 0, :m1], wp, precision=hi)
    neg = jnp.einsum('biw,iohw->bohw', xq[:, :, 0, :m1], wn, precision=hi)
    xs = jnp.zeros((B, Co, Hout, Wf), jnp.complex64)
    xs = xs.at[:, :, :m0, :m1].set(pos)
    xs = xs.at[:, :, Hout - m0:, :m1].set(neg)
    x1 = jnp.fft.irfft2(xs, s=(Hout, Wpad), axes=(-2, -1))
    if pad > 0:
        x1 = x1[:, :, :-pad, :-pad]
    x2 = (jnp.einsum('oi,bihw->bohw', w_lin, x, precision=hi)
          + b_lin[None, :, None, None])
    s = x1 + x2
    mean = jnp.mean(s, axis=(0, 2, 3), keepdims=True)
    var = jnp.mean((s - mean) ** 2, axis=(0, 2, 3), keepdims=True)
    y = (s - mean) / jnp.sqrt(var + eps)
    y = y * gamma[None, :, None, None] + beta[None, :, None, None]
    return jnp.maximum(y, 0.0)


if __name__ == "__main__":
    # small shapes consistent with the module
    B, Ci, Co, H, W = 2, 4, 4, 16, 16
    modes = (4, 5)                      # m0 <= H, m1 <= W//2+1
    m0, m1 = modes

    key = jax.random.PRNGKey(0)
    k = jax.random.split(key, 10)
    x = jax.random.normal(k[0], (B, Ci, H, W), jnp.float32)

    # deterministic synthetic parameters (shapes from __init__; not a checkpoint)
    scale = (6.0 / (Ci + Co)) ** 0.5 * 0.5
    wp = ((jax.random.normal(k[1], (Ci, Co, m0, m1), jnp.float32)
           + 1j * jax.random.normal(k[2], (Ci, Co, m0, m1), jnp.float32))
          * scale).astype(jnp.complex64)
    wn = ((jax.random.normal(k[3], (Ci, Co, m0, m1), jnp.float32)
           + 1j * jax.random.normal(k[4], (Ci, Co, m0, m1), jnp.float32))
          * scale).astype(jnp.complex64)
    w_lin = jax.random.normal(k[5], (Co, Ci), jnp.float32) * 0.3   # nn.Linear weight
    b_lin = jax.random.normal(k[6], (Co,), jnp.float32) * 0.1      # nn.Linear bias
    gamma = 1.0 + 0.1 * jax.random.normal(k[7], (Co,), jnp.float32)  # BN weight
    beta = 0.1 * jax.random.normal(k[8], (Co,), jnp.float32)         # BN bias

    ref = jax.block_until_ready(
        reference(x, wp, wn, w_lin, b_lin, gamma, beta, modes, pad=0))

    # f32 local path: tight structural check (also verifies bias cancellation)
    out_f32 = jax.block_until_ready(
        fno_block_1p1d(x, wp, wn, w_lin, b_lin, gamma, beta, modes, pad=0,
                       local_dtype=jnp.float32))
    assert out_f32.shape == (B, Co, H, W) and out_f32.dtype == jnp.float32
    err_f32 = float(jnp.max(jnp.abs(out_f32 - ref)))
    assert err_f32 < 5e-3, f"f32 mismatch vs reference: {err_f32}"

    # default bf16-input local path (HBM-bound kernel): looser tolerance
    out_bf16 = jax.block_until_ready(
        fno_block_1p1d(x, wp, wn, w_lin, b_lin, gamma, beta, modes, pad=0))
    assert out_bf16.shape == (B, Co, H, W) and out_bf16.dtype == jnp.float32
    err_bf16 = float(jnp.max(jnp.abs(out_bf16 - ref)))
    assert err_bf16 < 5e-2, f"bf16 mismatch vs reference: {err_bf16}"

    print("KERNEL_OK")
</pallas_src>

<mosaic_0001>
module attributes {stable_mosaic.version = 11 : i64} {
  func.func @spectral_mix_kernel(%arg0: i32, %arg1: memref<4x2x1x128xf32, #tpu.memory_space<vmem>>, %arg2: memref<4x2x1x128xf32, #tpu.memory_space<vmem>>, %arg3: memref<4x32x128xf32, #tpu.memory_space<vmem>>, %arg4: memref<4x32x128xf32, #tpu.memory_space<vmem>>, %arg5: memref<2x32x128xf32, #tpu.memory_space<vmem>>, %arg6: memref<2x32x128xf32, #tpu.memory_space<vmem>>) attributes {dimension_semantics = [#tpu.dimension_semantics<parallel>], iteration_bounds = array<i64: 1>, scalar_prefetch = 0 : i64, scratch_operands = 0 : i64, tpu.core_type = #tpu.core_type<tc>, window_params = [{pipeline_mode = #tpu.pipeline_mode<synchronous>, transform_indices = @transform_0, window_bounds = array<i64: 4, 2, 1, 128>}, {pipeline_mode = #tpu.pipeline_mode<synchronous>, transform_indices = @transform_1, window_bounds = array<i64: 4, 2, 1, 128>}, {transform_indices = @transform_2, window_bounds = array<i64: 4, 32, 128>}, {transform_indices = @transform_3, window_bounds = array<i64: 4, 32, 128>}, {transform_indices = @transform_4, window_bounds = array<i64: 2, 32, 128>}, {transform_indices = @transform_5, window_bounds = array<i64: 2, 32, 128>}]} {
    %c0 = arith.constant 0 : index
    %c0_0 = arith.constant 0 : index
    %c0_1 = arith.constant 0 : index
    %c0_2 = arith.constant 0 : index
    %0 = vector.load %arg1[%c0, %c0_0, %c0_1, %c0_2] : memref<4x2x1x128xf32, #tpu.memory_space<vmem>>, vector<1x2x1x128xf32>
    %1 = vector.shape_cast %0 : vector<1x2x1x128xf32> to vector<2x1x128xf32>
    %c0_3 = arith.constant 0 : index
    %c0_4 = arith.constant 0 : index
    %c0_5 = arith.constant 0 : index
    %c0_6 = arith.constant 0 : index
    %2 = vector.load %arg2[%c0_3, %c0_4, %c0_5, %c0_6] : memref<4x2x1x128xf32, #tpu.memory_space<vmem>>, vector<1x2x1x128xf32>
    %3 = vector.shape_cast %2 : vector<1x2x1x128xf32> to vector<2x1x128xf32>
    %c0_7 = arith.constant 0 : index
    %c0_8 = arith.constant 0 : index
    %c0_9 = arith.constant 0 : index
    %4 = vector.load %arg3[%c0_7, %c0_8, %c0_9] : memref<4x32x128xf32, #tpu.memory_space<vmem>>, vector<1x32x128xf32>
    %5 = vector.shape_cast %4 : vector<1x32x128xf32> to vector<32x128xf32>
    %c0_10 = arith.constant 0 : index
    %c0_11 = arith.constant 0 : index
    %c0_12 = arith.constant 0 : index
    %6 = vector.load %arg4[%c0_10, %c0_11, %c0_12] : memref<4x32x128xf32, #tpu.memory_space<vmem>>, vector<1x32x128xf32>
    %7 = vector.shape_cast %6 : vector<1x32x128xf32> to vector<32x128xf32>
    %8 = vector.shape_cast %5 : vector<32x128xf32> to vector<1x32x128xf32>
    %9 = vector.broadcast %1 : vector<2x1x128xf32> to vector<2x32x128xf32>
    %10 = vector.broadcast %8 : vector<1x32x128xf32> to vector<2x32x128xf32>
    %11 = arith.mulf %9, %10 : vector<2x32x128xf32>
    %12 = vector.shape_cast %7 : vector<32x128xf32> to vector<1x32x128xf32>
    %13 = vector.broadcast %3 : vector<2x1x128xf32> to vector<2x32x128xf32>
    %14 = vector.broadcast %12 : vector<1x32x128xf32> to vector<2x32x128xf32>
    %15 = arith.mulf %13, %14 : vector<2x32x128xf32>
    %16 = arith.subf %11, %15 : vector<2x32x128xf32>
    %17 = vector.shape_cast %7 : vector<32x128xf32> to vector<1x32x128xf32>
    %18 = vector.broadcast %1 : vector<2x1x128xf32> to vector<2x32x128xf32>
    %19 = vector.broadcast %17 : vector<1x32x128xf32> to vector<2x32x128xf32>
    %20 = arith.mulf %18, %19 : vector<2x32x128xf32>
    %21 = vector.shape_cast %5 : vector<32x128xf32> to vector<1x32x128xf32>
    %22 = vector.broadcast %3 : vector<2x1x128xf32> to vector<2x32x128xf32>
    %23 = vector.broadcast %21 : vector<1x32x128xf32> to vector<2x32x128xf32>
    %24 = arith.mulf %22, %23 : vector<2x32x128xf32>
    %25 = arith.addf %20, %24 : vector<2x32x128xf32>
    %c1 = arith.constant 1 : index
    %c0_13 = arith.constant 0 : index
    %c0_14 = arith.constant 0 : index
    %c0_15 = arith.constant 0 : index
    %26 = vector.load %arg1[%c1, %c0_13, %c0_14, %c0_15] : memref<4x2x1x128xf32, #tpu.memory_space<vmem>>, vector<1x2x1x128xf32>
    %27 = vector.shape_cast %26 : vector<1x2x1x128xf32> to vector<2x1x128xf32>
    %c1_16 = arith.constant 1 : index
    %c0_17 = arith.constant 0 : index
    %c0_18 = arith.constant 0 : index
    %c0_19 = arith.constant 0 : index
    %28 = vector.load %arg2[%c1_16, %c0_17, %c0_18, %c0_19] : memref<4x2x1x128xf32, #tpu.memory_space<vmem>>, vector<1x2x1x128xf32>
    %29 = vector.shape_cast %28 : vector<1x2x1x128xf32> to vector<2x1x128xf32>
    %c1_20 = arith.constant 1 : index
    %c0_21 = arith.constant 0 : index
    %c0_22 = arith.constant 0 : index
    %30 = vector.load %arg3[%c1_20, %c0_21, %c0_22] : memref<4x32x128xf32, #tpu.memory_space<vmem>>, vector<1x32x128xf32>
    %31 = vector.shape_cast %30 : vector<1x32x128xf32> to vector<32x128xf32>
    %c1_23 = arith.constant 1 : index
    %c0_24 = arith.constant 0 : index
    %c0_25 = arith.constant 0 : index
    %32 = vector.load %arg4[%c1_23, %c0_24, %c0_25] : memref<4x32x128xf32, #tpu.memory_space<vmem>>, vector<1x32x128xf32>
    %33 = vector.shape_cast %32 : vector<1x32x128xf32> to vector<32x128xf32>
    %34 = vector.shape_cast %31 : vector<32x128xf32> to vector<1x32x128xf32>
    %35 = vector.broadcast %27 : vector<2x1x128xf32> to vector<2x32x128xf32>
    %36 = vector.broadcast %34 : vector<1x32x128xf32> to vector<2x32x128xf32>
    %37 = arith.mulf %35, %36 : vector<2x32x128xf32>
    %38 = arith.addf %16, %37 : vector<2x32x128xf32>
    %39 = vector.shape_cast %33 : vector<32x128xf32> to vector<1x32x128xf32>
    %40 = vector.broadcast %29 : vector<2x1x128xf32> to vector<2x32x128xf32>
    %41 = vector.broadcast %39 : vector<1x32x128xf32> to vector<2x32x128xf32>
    %42 = arith.mulf %40, %41 : vector<2x32x128xf32>
    %43 = arith.subf %38, %42 : vector<2x32x128xf32>
    %44 = vector.shape_cast %33 : vector<32x128xf32> to vector<1x32x128xf32>
    %45 = vector.broadcast %27 : vector<2x1x128xf32> to vector<2x32x128xf32>
    %46 = vector.broadcast %44 : vector<1x32x128xf32> to vector<2x32x128xf32>
    %47 = arith.mulf %45, %46 : vector<2x32x128xf32>
    %48 = arith.addf %25, %47 : vector<2x32x128xf32>
    %49 = vector.shape_cast %31 : vector<32x128xf32> to vector<1x32x128xf32>
    %50 = vector.broadcast %29 : vector<2x1x128xf32> to vector<2x32x128xf32>
    %51 = vector.broadcast %49 : vector<1x32x128xf32> to vector<2x32x128xf32>
    %52 = arith.mulf %50, %51 : vector<2x32x128xf32>
    %53 = arith.addf %48, %52 : vector<2x32x128xf32>
    %c2 = arith.constant 2 : index
    %c0_26 = arith.constant 0 : index
    %c0_27 = arith.constant 0 : index
    %c0_28 = arith.constant 0 : index
    %54 = vector.load %arg1[%c2, %c0_26, %c0_27, %c0_28] : memref<4x2x1x128xf32, #tpu.memory_space<vmem>>, vector<1x2x1x128xf32>
    %55 = vector.shape_cast %54 : vector<1x2x1x128xf32> to vector<2x1x128xf32>
    %c2_29 = arith.constant 2 : index
    %c0_30 = arith.constant 0 : index
    %c0_31 = arith.constant 0 : index
    %c0_32 = arith.constant 0 : index
    %56 = vector.load %arg2[%c2_29, %c0_30, %c0_31, %c0_32] : memref<4x2x1x128xf32, #tpu.memory_space<vmem>>, vector<1x2x1x128xf32>
    %57 = vector.shape_cast %56 : vector<1x2x1x128xf32> to vector<2x1x128xf32>
    %c2_33 = arith.constant 2 : index
    %c0_34 = arith.constant 0 : index
    %c0_35 = arith.constant 0 : index
    %58 = vector.load %arg3[%c2_33, %c0_34, %c0_35] : memref<4x32x128xf32, #tpu.memory_space<vmem>>, vector<1x32x128xf32>
    %59 = vector.shape_cast %58 : vector<1x32x128xf32> to vector<32x128xf32>
    %c2_36 = arith.constant 2 : index
    %c0_37 = arith.constant 0 : index
    %c0_38 = arith.constant 0 : index
    %60 = vector.load %arg4[%c2_36, %c0_37, %c0_38] : memref<4x32x128xf32, #tpu.memory_space<vmem>>, vector<1x32x128xf32>
    %61 = vector.shape_cast %60 : vector<1x32x128xf32> to vector<32x128xf32>
    %62 = vector.shape_cast %59 : vector<32x128xf32> to vector<1x32x128xf32>
    %63 = vector.broadcast %55 : vector<2x1x128xf32> to vector<2x32x128xf32>
    %64 = vector.broadcast %62 : vector<1x32x128xf32> to vector<2x32x128xf32>
    %65 = arith.mulf %63, %64 : vector<2x32x128xf32>
    %66 = arith.addf %43, %65 : vector<2x32x128xf32>
    %67 = vector.shape_cast %61 : vector<32x128xf32> to vector<1x32x128xf32>
    %68 = vector.broadcast %57 : vector<2x1x128xf32> to vector<2x32x128xf32>
    %69 = vector.broadcast %67 : vector<1x32x128xf32> to vector<2x32x128xf32>
    %70 = arith.mulf %68, %69 : vector<2x32x128xf32>
    %71 = arith.subf %66, %70 : vector<2x32x128xf32>
    %72 = vector.shape_cast %61 : vector<32x128xf32> to vector<1x32x128xf32>
    %73 = vector.broadcast %55 : vector<2x1x128xf32> to vector<2x32x128xf32>
    %74 = vector.broadcast %72 : vector<1x32x128xf32> to vector<2x32x128xf32>
    %75 = arith.mulf %73, %74 : vector<2x32x128xf32>
    %76 = arith.addf %53, %75 : vector<2x32x128xf32>
    %77 = vector.shape_cast %59 : vector<32x128xf32> to vector<1x32x128xf32>
    %78 = vector.broadcast %57 : vector<2x1x128xf32> to vector<2x32x128xf32>
    %79 = vector.broadcast %77 : vector<1x32x128xf32> to vector<2x32x128xf32>
    %80 = arith.mulf %78, %79 : vector<2x32x128xf32>
    %81 = arith.addf %76, %80 : vector<2x32x128xf32>
    %c3 = arith.constant 3 : index
    %c0_39 = arith.constant 0 : index
    %c0_40 = arith.constant 0 : index
    %c0_41 = arith.constant 0 : index
    %82 = vector.load %arg1[%c3, %c0_39, %c0_40, %c0_41] : memref<4x2x1x128xf32, #tpu.memory_space<vmem>>, vector<1x2x1x128xf32>
    %83 = vector.shape_cast %82 : vector<1x2x1x128xf32> to vector<2x1x128xf32>
    %c3_42 = arith.constant 3 : index
    %c0_43 = arith.constant 0 : index
    %c0_44 = arith.constant 0 : index
    %c0_45 = arith.constant 0 : index
    %84 = vector.load %arg2[%c3_42, %c0_43, %c0_44, %c0_45] : memref<4x2x1x128xf32, #tpu.memory_space<vmem>>, vector<1x2x1x128xf32>
    %85 = vector.shape_cast %84 : vector<1x2x1x128xf32> to vector<2x1x128xf32>
    %c3_46 = arith.constant 3 : index
    %c0_47 = arith.constant 0 : index
    %c0_48 = arith.constant 0 : index
    %86 = vector.load %arg3[%c3_46, %c0_47, %c0_48] : memref<4x32x128xf32, #tpu.memory_space<vmem>>, vector<1x32x128xf32>
    %87 = vector.shape_cast %86 : vector<1x32x128xf32> to vector<32x128xf32>
    %c3_49 = arith.constant 3 : index
    %c0_50 = arith.constant 0 : index
    %c0_51 = arith.constant 0 : index
    %88 = vector.load %arg4[%c3_49, %c0_50, %c0_51] : memref<4x32x128xf32, #tpu.memory_space<vmem>>, vector<1x32x128xf32>
    %89 = vector.shape_cast %88 : vector<1x32x128xf32> to vector<32x128xf32>
    %90 = vector.shape_cast %87 : vector<32x128xf32> to vector<1x32x128xf32>
    %91 = vector.broadcast %83 : vector<2x1x128xf32> to vector<2x32x128xf32>
    %92 = vector.broadcast %90 : vector<1x32x128xf32> to vector<2x32x128xf32>
    %93 = arith.mulf %91, %92 : vector<2x32x128xf32>
    %94 = arith.addf %71, %93 : vector<2x32x128xf32>
    %95 = vector.shape_cast %89 : vector<32x128xf32> to vector<1x32x128xf32>
    %96 = vector.broadcast %85 : vector<2x1x128xf32> to vector<2x32x128xf32>
    %97 = vector.broadcast %95 : vector<1x32x128xf32> to vector<2x32x128xf32>
    %98 = arith.mulf %96, %97 : vector<2x32x128xf32>
    %99 = arith.subf %94, %98 : vector<2x32x128xf32>
    %100 = vector.shape_cast %89 : vector<32x128xf32> to vector<1x32x128xf32>
    %101 = vector.broadcast %83 : vector<2x1x128xf32> to vector<2x32x128xf32>
    %102 = vector.broadcast %100 : vector<1x32x128xf32> to vector<2x32x128xf32>
    %103 = arith.mulf %101, %102 : vector<2x32x128xf32>
    %104 = arith.addf %81, %103 : vector<2x32x128xf32>
    %105 = vector.shape_cast %87 : vector<32x128xf32> to vector<1x32x128xf32>
    %106 = vector.broadcast %85 : vector<2x1x128xf32> to vector<2x32x128xf32>
    %107 = vector.broadcast %105 : vector<1x32x128xf32> to vector<2x32x128xf32>
    %108 = arith.mulf %106, %107 : vector<2x32x128xf32>
    %109 = arith.addf %104, %108 : vector<2x32x128xf32>
    %c0_52 = arith.constant 0 : index
    %c0_53 = arith.constant 0 : index
    %c0_54 = arith.constant 0 : index
    %110 = vector.load %arg5[%c0_52, %c0_53, %c0_54] : memref<2x32x128xf32, #tpu.memory_space<vmem>>, vector<2x32x128xf32>
    tpu.vector_store %arg5[%c0_52, %c0_53, %c0_54], %99 {strides = array<i32>} : memref<2x32x128xf32, #tpu.memory_space<vmem>>, vector<2x32x128xf32>,
    %c0_55 = arith.constant 0 : index
    %c0_56 = arith.constant 0 : index
    %c0_57 = arith.constant 0 : index
    %111 = vector.load %arg6[%c0_55, %c0_56, %c0_57] : memref<2x32x128xf32, #tpu.memory_space<vmem>>, vector<2x32x128xf32>
    tpu.vector_store %arg6[%c0_55, %c0_56, %c0_57], %109 {strides = array<i32>} : memref<2x32x128xf32, #tpu.memory_space<vmem>>, vector<2x32x128xf32>,
    return
  }
  func.func @transform_0(%arg0: i32) -> (i32, i32, i32, i32) {
    %c0_i32 = arith.constant 0 : i32
    %c0_i32_0 = arith.constant 0 : i32
    %c0_i32_1 = arith.constant 0 : i32
    %c0_i32_2 = arith.constant 0 : i32
    %c0_i32_3 = arith.constant 0 : i32
    return %c0_i32, %c0_i32_0, %c0_i32_1, %c0_i32_2 : i32, i32, i32, i32
  }
  func.func @transform_1(%arg0: i32) -> (i32, i32, i32, i32) {
    %c0_i32 = arith.constant 0 : i32
    %c0_i32_0 = arith.constant 0 : i32
    %c0_i32_1 = arith.constant 0 : i32
    %c0_i32_2 = arith.constant 0 : i32
    %c0_i32_3 = arith.constant 0 : i32
    return %c0_i32, %c0_i32_0, %c0_i32_1, %c0_i32_2 : i32, i32, i32, i32
  }
  func.func @transform_2(%arg0: i32) -> (i32, i32, i32) {
    %c0_i32 = arith.constant 0 : i32
    %c0_i32_0 = arith.constant 0 : i32
    %c0_i32_1 = arith.constant 0 : i32
    return %c0_i32, %arg0, %c0_i32_0 : i32, i32, i32
  }
  func.func @transform_3(%arg0: i32) -> (i32, i32, i32) {
    %c0_i32 = arith.constant 0 : i32
    %c0_i32_0 = arith.constant 0 : i32
    %c0_i32_1 = arith.constant 0 : i32
    return %c0_i32, %arg0, %c0_i32_0 : i32, i32, i32
  }
  func.func @transform_4(%arg0: i32) -> (i32, i32, i32) {
    %c0_i32 = arith.constant 0 : i32
    %c0_i32_0 = arith.constant 0 : i32
    %c0_i32_1 = arith.constant 0 : i32
    return %c0_i32, %arg0, %c0_i32_0 : i32, i32, i32
  }
  func.func @transform_5(%arg0: i32) -> (i32, i32, i32) {
    %c0_i32 = arith.constant 0 : i32
    %c0_i32_0 = arith.constant 0 : i32
    %c0_i32_1 = arith.constant 0 : i32
    return %c0_i32, %arg0, %c0_i32_0 : i32, i32, i32
  }
}

</mosaic_0001>

<llo_original>
// kernel: tpu_custom_call.1
$region0: #{tpu_custom_call.1}
  #allocation0 [shape = 'u32[]', space=smem, size = 0x4, offset = 0x4, fixed_abs, tag = 'smem constant byte address 0x4 - core index']
  #allocation1 [shape = 'u32[72,128]{1,0:T(1,128)}', space=vmem, size = 0x9000, scoped, tag = 'internal scratch']
  %s0 = inlined_call_operand.hbm [shape: f32[4,2,1,128], index: 0, kind: input, shape index: {}]
  %s1 = inlined_call_operand.hbm [shape: f32[4,2,1,128], index: 1, kind: input, shape index: {}]
  %s2 = inlined_call_operand.hbm [shape: f32[4,32,128], index: 2, kind: input, shape index: {}]
  %s3 = inlined_call_operand.hbm [shape: f32[4,32,128], index: 3, kind: input, shape index: {}]
  %s4 = inlined_call_operand.hbm [shape: f32[2,32,128], index: 4, kind: output, shape index: {0}]
  %s5 = inlined_call_operand.hbm [shape: f32[2,32,128], index: 5, kind: output, shape index: {1}]
  %6 = xla_tuple %s4, %s5
  %s7 = sld [smem:[#allocation0]]
  $region50: #{tpu_custom_call.1} parent=0
    _
  %s9 = ssub.s32 1, %s7
  %s10 = scalar_select 0, %s9, %s7
  $region1: #{tpu_custom_call.1} parent=0
    #allocation2 [shape = 'u8[4096]{0}', space=vmem, size = 0x1000, scoped, tag = 'input window, operand 0, single buffered']
    #allocation3 [shape = 's32[1]{0}', space=sflag, size = 0x4, scoped, tag = 'scoped memory for tpu_custom_call.1']
    #allocation4 [shape = 's32[1]{0}', space=sflag, size = 0x4, scoped, tag = 'scoped memory for tpu_custom_call.1']
    #allocation5 [shape = 'u8[4096]{0}', space=vmem, size = 0x1000, scoped, tag = 'input window, operand 1, single buffered']
    #allocation6 [shape = 's32[1]{0}', space=sflag, size = 0x4, scoped, tag = 'scoped memory for tpu_custom_call.1']
    #allocation7 [shape = 'u8[65536]{0}', space=vmem, size = 0x10000, scoped, tag = 'input window, operand 2, single buffered']
    #allocation8 [shape = 'u8[65536]{0}', space=vmem, size = 0x10000, scoped, tag = 'input window, operand 3, single buffered']
    #allocation9 [shape = 's32[1]{0}', space=sflag, size = 0x4, scoped, tag = 'scoped memory for tpu_custom_call.1']
    #allocation10 [shape = 'u8[32768]{0}', space=vmem, size = 0x8000, scoped, tag = 'output window, operand 0, single buffered']
    #allocation11 [shape = 'u8[32768]{0}', space=vmem, size = 0x8000, scoped, tag = 'output window, operand 1, single buffered']
    #allocation12 [shape = 's32[1]{0}', space=sflag, size = 0x4, scoped, tag = 'scoped memory for tpu_custom_call.1']
    %11 = vsyncpa [#allocation3], 0
    %12 = vsyncpa [#allocation6], 0
    %13 = vsyncpa [#allocation9], 0
    %14 = vsyncpa [#allocation4], 0
    %15 = vsyncpa [#allocation12], 0
    // Predicated region
    $region2: #{tpu_custom_call.1} parent=1 // pred_check
      _
    $region3: #{tpu_custom_call.1} parent=1 // pred_check_branch
      %17 = sbr.rel (0) target = $region5
    $region4: #{tpu_custom_call.1} parent=1 // pred_region
      %19 = vsyncadd [#allocation3], 0
      %s20 = sshll.u32 %s0, 4
      %s21 = int_to_ptr.hbm [resolvable:$true] %s20
      %s22 = sshll.u32 [#allocation2], 4
      %s23 = int_to_ptr.vmem [resolvable:$true] %s22
      %28 = dma.hbm_to_vmem [thread:$0]  %s21, 128, %s23, [#allocation3], 16, 16, 1
    $region5: #{tpu_custom_call.1} parent=1 // pred_fallthru
      _
    // Predicated region
    $region6: #{tpu_custom_call.1} parent=1 // pred_check
      _
    $region7: #{tpu_custom_call.1} parent=1 // pred_check_branch
      %30 = sbr.rel (0) target = $region9
    $region8: #{tpu_custom_call.1} parent=1 // pred_region
      %32 = vsyncadd [#allocation6], 0
      %s33 = sshll.u32 %s1, 4
      %s34 = int_to_ptr.hbm [resolvable:$true] %s33
      %s35 = sshll.u32 [#allocation5], 4
      %s36 = int_to_ptr.vmem [resolvable:$true] %s35
      %41 = dma.hbm_to_vmem [thread:$0]  %s34, 128, %s36, [#allocation6], 16, 16, 1
    $region9: #{tpu_custom_call.1} parent=1 // pred_fallthru
      _
    // Predicated region
    $region10: #{tpu_custom_call.1} parent=1 // pred_check
      _
    $region11: #{tpu_custom_call.1} parent=1 // pred_check_branch
      %43 = sbr.rel (0) target = $region13
    $region12: #{tpu_custom_call.1} parent=1 // pred_region
      %45 = vsyncadd [#allocation6], 0
      %s46 = sshll.u32 %s2, 4
      %s47 = int_to_ptr.hbm [resolvable:$true] %s46
      %s48 = sshll.u32 [#allocation7], 4
      %s49 = int_to_ptr.vmem [resolvable:$true] %s48
      %54 = dma.hbm_to_vmem [thread:$0]  %s47, 2048, %s49, [#allocation6], 128, 128, 8
    $region13: #{tpu_custom_call.1} parent=1 // pred_fallthru
      _
    // Predicated region
    $region14: #{tpu_custom_call.1} parent=1 // pred_check
      _
    $region15: #{tpu_custom_call.1} parent=1 // pred_check_branch
      %56 = sbr.rel (0) target = $region17
    $region16: #{tpu_custom_call.1} parent=1 // pred_region
      %58 = vsyncadd [#allocation9], 0
      %s59 = sshll.u32 %s3, 4
      %s60 = int_to_ptr.hbm [resolvable:$true] %s59
      %s61 = sshll.u32 [#allocation8], 4
      %s62 = int_to_ptr.vmem [resolvable:$true] %s61
      %67 = dma.hbm_to_vmem [thread:$0]  %s60, 2048, %s62, [#allocation9], 128, 128, 8
    $region17: #{tpu_custom_call.1} parent=1 // pred_fallthru
      _
    // Predicated region
    $region18: #{tpu_custom_call.1} parent=1 // pred_check
      _
    $region19: #{tpu_custom_call.1} parent=1 // pred_check_branch
      %69 = sbr.rel (0) target = $region21
    $region20: #{tpu_custom_call.1} parent=1 // pred_region
      %71 = dma.done [#allocation3], 128
    $region21: #{tpu_custom_call.1} parent=1 // pred_fallthru
      _
    // Predicated region
    $region22: #{tpu_custom_call.1} parent=1 // pred_check
      _
    $region23: #{tpu_custom_call.1} parent=1 // pred_check_branch
      %73 = sbr.rel (0) target = $region25
    $region24: #{tpu_custom_call.1} parent=1 // pred_region
      %75 = dma.done [#allocation6], 128
    $region25: #{tpu_custom_call.1} parent=1 // pred_fallthru
      _
    // Predicated region
    $region26: #{tpu_custom_call.1} parent=1 // pred_check
      _
    $region27: #{tpu_custom_call.1} parent=1 // pred_check_branch
      %77 = sbr.rel (0) target = $region29
    $region28: #{tpu_custom_call.1} parent=1 // pred_region
      %79 = dma.done [#allocation6], 2048
    $region29: #{tpu_custom_call.1} parent=1 // pred_fallthru
      _
    // Predicated region
    $region30: #{tpu_custom_call.1} parent=1 // pred_check
      _
    $region31: #{tpu_custom_call.1} parent=1 // pred_check_branch
      %81 = sbr.rel (0) target = $region33
    $region32: #{tpu_custom_call.1} parent=1 // pred_region
      %83 = dma.done [#allocation9], 2048
    $region33: #{tpu_custom_call.1} parent=1 // pred_fallthru
      _
    %v84 = vld [vmem:[#allocation2] sm:$0x1]
    %v85 = vld [vmem:[#allocation2 + $0x1] sm:$0x1]
    %v86 = vld [vmem:[#allocation5] sm:$0x1]
    %v87 = vld [vmem:[#allocation5 + $0x1] sm:$0x1]
    %v88 = vld [vmem:[#allocation7] sm:$0xff]
    %v89 = vld [vmem:[#allocation7 + $0x8] sm:$0xff]
    %v90 = vld [vmem:[#allocation7 + $0x10] sm:$0xff]
    %v91 = vld [vmem:[#allocation7 + $0x18] sm:$0xff]
    %v92 = vld [vmem:[#allocation8] sm:$0xff]
    %v93 = vld [vmem:[#allocation8 + $0x8] sm:$0xff]
    %v94 = vld [vmem:[#allocation8 + $0x10] sm:$0xff]
    %v95 = vld [vmem:[#allocation8 + $0x18] sm:$0xff]
    %v98 = vperm.slane %v84, 0
    %v99 = vperm.slane %v85, 0
    %v102 = vmul.f32 %v98, %v88
    %v103 = vmul.f32 %v98, %v89
    %v104 = vmul.f32 %v98, %v90
    %v105 = vmul.f32 %v98, %v91
    %v106 = vmul.f32 %v99, %v88
    %v107 = vmul.f32 %v99, %v89
    %v108 = vmul.f32 %v99, %v90
    %v109 = vmul.f32 %v99, %v91
    %v112 = vperm.slane %v86, 0
    %v113 = vperm.slane %v87, 0
    %v116 = vmul.f32 %v112, %v92
    %v117 = vmul.f32 %v112, %v93
    %v118 = vmul.f32 %v112, %v94
    %v119 = vmul.f32 %v112, %v95
    %v120 = vmul.f32 %v113, %v92
    %v121 = vmul.f32 %v113, %v93
    %v122 = vmul.f32 %v113, %v94
    %v123 = vmul.f32 %v113, %v95
    %v124 = vsub.f32 %v102, %v116
    %v125 = vsub.f32 %v103, %v117
    %v126 = vsub.f32 %v104, %v118
    %v127 = vsub.f32 %v105, %v119
    %v128 = vsub.f32 %v106, %v120
    %v129 = vsub.f32 %v107, %v121
    %v130 = vsub.f32 %v108, %v122
    %v131 = vsub.f32 %v109, %v123
    %v132 = vmul.f32 %v98, %v92
    %v133 = vmul.f32 %v98, %v93
    %v134 = vmul.f32 %v98, %v94
    %v135 = vmul.f32 %v98, %v95
    %v136 = vmul.f32 %v99, %v92
    %v137 = vmul.f32 %v99, %v93
    %v138 = vmul.f32 %v99, %v94
    %v139 = vmul.f32 %v99, %v95
    %v140 = vmul.f32 %v112, %v88
    %v141 = vmul.f32 %v112, %v89
    %v142 = vmul.f32 %v112, %v90
    %v143 = vmul.f32 %v112, %v91
    %v144 = vmul.f32 %v113, %v88
    %v145 = vmul.f32 %v113, %v89
    %v146 = vmul.f32 %v113, %v90
    %v147 = vmul.f32 %v113, %v91
    %v148 = vadd.f32 %v132, %v140
    %v149 = vadd.f32 %v133, %v141
    %v150 = vadd.f32 %v134, %v142
    %v151 = vadd.f32 %v135, %v143
    %v152 = vadd.f32 %v136, %v144
    %v153 = vadd.f32 %v137, %v145
    %v154 = vadd.f32 %v138, %v146
    %v155 = vadd.f32 %v139, %v147
    %s156 = scalar_lea.vmem [#allocation2], 2
    %v157 = vld [vmem:[%s156] sm:$0x1]
    %v158 = vld [vmem:[%s156 + $0x1] sm:$0x1]
    %s159 = scalar_lea.vmem [#allocation5], 2
    %v160 = vld [vmem:[%s159] sm:$0x1]
    %v161 = vld [vmem:[%s159 + $0x1] sm:$0x1]
    %s162 = scalar_lea.vmem [#allocation7], 32
    %v163 = vld [vmem:[%s162] sm:$0xff]
    %v164 = vld [vmem:[%s162 + $0x8] sm:$0xff]
    %v165 = vld [vmem:[%s162 + $0x10] sm:$0xff]
    %v166 = vld [vmem:[%s162 + $0x18] sm:$0xff]
    %s167 = scalar_lea.vmem [#allocation8], 32
    %v168 = vld [vmem:[%s167] sm:$0xff]
    %v169 = vld [vmem:[%s167 + $0x8] sm:$0xff]
    %v170 = vld [vmem:[%s167 + $0x10] sm:$0xff]
    %v171 = vld [vmem:[%s167 + $0x18] sm:$0xff]
    %v174 = vperm.slane %v157, 0
    %v175 = vperm.slane %v158, 0
    %v178 = vmul.f32 %v174, %v163
    %v179 = vmul.f32 %v174, %v164
    %v180 = vmul.f32 %v174, %v165
    %v181 = vmul.f32 %v174, %v166
    %v182 = vmul.f32 %v175, %v163
    %v183 = vmul.f32 %v175, %v164
    %v184 = vmul.f32 %v175, %v165
    %v185 = vmul.f32 %v175, %v166
    %v186 = vadd.f32 %v124, %v178
    %v187 = vadd.f32 %v125, %v179
    %v188 = vadd.f32 %v126, %v180
    %v189 = vadd.f32 %v127, %v181
    %v190 = vadd.f32 %v128, %v182
    %v191 = vadd.f32 %v129, %v183
    %v192 = vadd.f32 %v130, %v184
    %v193 = vadd.f32 %v131, %v185
    %v196 = vperm.slane %v160, 0
    %v197 = vperm.slane %v161, 0
    %v200 = vmul.f32 %v196, %v168
    %v201 = vmul.f32 %v196, %v169
    %v202 = vmul.f32 %v196, %v170
    %v203 = vmul.f32 %v196, %v171
    %v204 = vmul.f32 %v197, %v168
    %v205 = vmul.f32 %v197, %v169
    %v206 = vmul.f32 %v197, %v170
    %v207 = vmul.f32 %v197, %v171
    %v208 = vsub.f32 %v186, %v200
    %v209 = vsub.f32 %v187, %v201
    %v210 = vsub.f32 %v188, %v202
    %v211 = vsub.f32 %v189, %v203
    %v212 = vsub.f32 %v190, %v204
    %v213 = vsub.f32 %v191, %v205
    %v214 = vsub.f32 %v192, %v206
    %v215 = vsub.f32 %v193, %v207
    %v216 = vmul.f32 %v174, %v168
    %v217 = vmul.f32 %v174, %v169
    %v218 = vmul.f32 %v174, %v170
    %v219 = vmul.f32 %v174, %v171
    %v220 = vmul.f32 %v175, %v168
    %v221 = vmul.f32 %v175, %v169
    %v222 = vmul.f32 %v175, %v170
    %v223 = vmul.f32 %v175, %v171
    %v224 = vadd.f32 %v148, %v216
    %v225 = vadd.f32 %v149, %v217
    %v226 = vadd.f32 %v150, %v218
    %v227 = vadd.f32 %v151, %v219
    %v228 = vadd.f32 %v152, %v220
    %v229 = vadd.f32 %v153, %v221
    %v230 = vadd.f32 %v154, %v222
    %v231 = vadd.f32 %v155, %v223
    %v232 = vmul.f32 %v196, %v163
    %v233 = vmul.f32 %v196, %v164
    %v234 = vmul.f32 %v196, %v165
    %v235 = vmul.f32 %v196, %v166
    %v236 = vmul.f32 %v197, %v163
    %v237 = vmul.f32 %v197, %v164
    %v238 = vmul.f32 %v197, %v165
    %v239 = vmul.f32 %v197, %v166
    %v240 = vadd.f32 %v224, %v232
    %v241 = vadd.f32 %v225, %v233
    %v242 = vadd.f32 %v226, %v234
    %v243 = vadd.f32 %v227, %v235
    %v244 = vadd.f32 %v228, %v236
    %v245 = vadd.f32 %v229, %v237
    %v246 = vadd.f32 %v230, %v238
    %v247 = vadd.f32 %v231, %v239
    %s248 = scalar_lea.vmem [#allocation2], 4
    %v249 = vld [vmem:[%s248] sm:$0x1]
    %v250 = vld [vmem:[%s248 + $0x1] sm:$0x1]
    %s251 = scalar_lea.vmem [#allocation5], 4
    %v252 = vld [vmem:[%s251] sm:$0x1]
    %v253 = vld [vmem:[%s251 + $0x1] sm:$0x1]
    %s254 = scalar_lea.vmem [#allocation7], 64
    %v255 = vld [vmem:[%s254] sm:$0xff]
    %v256 = vld [vmem:[%s254 + $0x8] sm:$0xff]
    %v257 = vld [vmem:[%s254 + $0x10] sm:$0xff]
    %v258 = vld [vmem:[%s254 + $0x18] sm:$0xff]
    %s259 = scalar_lea.vmem [#allocation8], 64
    %v260 = vld [vmem:[%s259] sm:$0xff]
    %v261 = vld [vmem:[%s259 + $0x8] sm:$0xff]
    %v262 = vld [vmem:[%s259 + $0x10] sm:$0xff]
    %v263 = vld [vmem:[%s259 + $0x18] sm:$0xff]
    %v266 = vperm.slane %v249, 0
    %v267 = vperm.slane %v250, 0
    %v270 = vmul.f32 %v266, %v255
    %v271 = vmul.f32 %v266, %v256
    %v272 = vmul.f32 %v266, %v257
    %v273 = vmul.f32 %v266, %v258
    %v274 = vmul.f32 %v267, %v255
    %v275 = vmul.f32 %v267, %v256
    %v276 = vmul.f32 %v267, %v257
    %v277 = vmul.f32 %v267, %v258
    %v278 = vadd.f32 %v208, %v270
    %v279 = vadd.f32 %v209, %v271
    %v280 = vadd.f32 %v210, %v272
    %v281 = vadd.f32 %v211, %v273
    %v282 = vadd.f32 %v212, %v274
    %v283 = vadd.f32 %v213, %v275
    %v284 = vadd.f32 %v214, %v276
    %v285 = vadd.f32 %v215, %v277
    %v288 = vperm.slane %v252, 0
    %v289 = vperm.slane %v253, 0
    %v292 = vmul.f32 %v288, %v260
    %v293 = vmul.f32 %v288, %v261
    %v294 = vmul.f32 %v288, %v262
    %v295 = vmul.f32 %v288, %v263
    %v296 = vmul.f32 %v289, %v260
    %v297 = vmul.f32 %v289, %v261
    %v298 = vmul.f32 %v289, %v262
    %v299 = vmul.f32 %v289, %v263
    %v300 = vsub.f32 %v278, %v292
    %v301 = vsub.f32 %v279, %v293
    %v302 = vsub.f32 %v280, %v294
    %v303 = vsub.f32 %v281, %v295
    %v304 = vsub.f32 %v282, %v296
    %v305 = vsub.f32 %v283, %v297
    %v306 = vsub.f32 %v284, %v298
    %v307 = vsub.f32 %v285, %v299
    %v308 = vmul.f32 %v266, %v260
    %v309 = vmul.f32 %v266, %v261
    %v310 = vmul.f32 %v266, %v262
    %v311 = vmul.f32 %v266, %v263
    %v312 = vmul.f32 %v267, %v260
    %v313 = vmul.f32 %v267, %v261
    %v314 = vmul.f32 %v267, %v262
    %v315 = vmul.f32 %v267, %v263
    %v316 = vadd.f32 %v240, %v308
    %v317 = vadd.f32 %v241, %v309
    %v318 = vadd.f32 %v242, %v310
    %v319 = vadd.f32 %v243, %v311
    %v320 = vadd.f32 %v244, %v312
    %v321 = vadd.f32 %v245, %v313
    %v322 = vadd.f32 %v246, %v314
    %v323 = vadd.f32 %v247, %v315
    %v324 = vmul.f32 %v288, %v255
    %v325 = vmul.f32 %v288, %v256
    %v326 = vmul.f32 %v288, %v257
    %v327 = vmul.f32 %v288, %v258
    %v328 = vmul.f32 %v289, %v255
    %v329 = vmul.f32 %v289, %v256
    %v330 = vmul.f32 %v289, %v257
    %v331 = vmul.f32 %v289, %v258
    %v332 = vadd.f32 %v316, %v324
    %v333 = vadd.f32 %v317, %v325
    %v334 = vadd.f32 %v318, %v326
    %v335 = vadd.f32 %v319, %v327
    %v336 = vadd.f32 %v320, %v328
    %v337 = vadd.f32 %v321, %v329
    %v338 = vadd.f32 %v322, %v330
    %v339 = vadd.f32 %v323, %v331
    %s340 = scalar_lea.vmem [#allocation2], 6
    %v341 = vld [vmem:[%s340] sm:$0x1]
    %v342 = vld [vmem:[%s340 + $0x1] sm:$0x1]
    %s343 = scalar_lea.vmem [#allocation5], 6
    %v344 = vld [vmem:[%s343] sm:$0x1]
    %v345 = vld [vmem:[%s343 + $0x1] sm:$0x1]
    %s346 = scalar_lea.vmem [#allocation7], 96
    %v347 = vld [vmem:[%s346] sm:$0xff]
    %v348 = vld [vmem:[%s346 + $0x8] sm:$0xff]
    %v349 = vld [vmem:[%s346 + $0x10] sm:$0xff]
    %v350 = vld [vmem:[%s346 + $0x18] sm:$0xff]
    %s351 = scalar_lea.vmem [#allocation8], 96
    %v352 = vld [vmem:[%s351] sm:$0xff]
    %v353 = vld [vmem:[%s351 + $0x8] sm:$0xff]
    %v354 = vld [vmem:[%s351 + $0x10] sm:$0xff]
    %v355 = vld [vmem:[%s351 + $0x18] sm:$0xff]
    %v358 = vperm.slane %v341, 0
    %v359 = vperm.slane %v342, 0
    %v362 = vmul.f32 %v358, %v347
    %v363 = vmul.f32 %v358, %v348
    %v364 = vmul.f32 %v358, %v349
    %v365 = vmul.f32 %v358, %v350
    %v366 = vmul.f32 %v359, %v347
    %v367 = vmul.f32 %v359, %v348
    %v368 = vmul.f32 %v359, %v349
    %v369 = vmul.f32 %v359, %v350
    %v370 = vadd.f32 %v300, %v362
    %v371 = vadd.f32 %v301, %v363
    %v372 = vadd.f32 %v302, %v364
    %v373 = vadd.f32 %v303, %v365
    %v374 = vadd.f32 %v304, %v366
    %v375 = vadd.f32 %v305, %v367
    %v376 = vadd.f32 %v306, %v368
    %v377 = vadd.f32 %v307, %v369
    %v380 = vperm.slane %v344, 0
    %v381 = vperm.slane %v345, 0
    %v384 = vmul.f32 %v380, %v352
    %v385 = vmul.f32 %v380, %v353
    %v386 = vmul.f32 %v380, %v354
    %v387 = vmul.f32 %v380, %v355
    %v388 = vmul.f32 %v381, %v352
    %v389 = vmul.f32 %v381, %v353
    %v390 = vmul.f32 %v381, %v354
    %v391 = vmul.f32 %v381, %v355
    %v392 = vsub.f32 %v370, %v384
    %v393 = vsub.f32 %v371, %v385
    %v394 = vsub.f32 %v372, %v386
    %v395 = vsub.f32 %v373, %v387
    %v396 = vsub.f32 %v374, %v388
    %v397 = vsub.f32 %v375, %v389
    %v398 = vsub.f32 %v376, %v390
    %v399 = vsub.f32 %v377, %v391
    %v400 = vmul.f32 %v358, %v352
    %v401 = vmul.f32 %v358, %v353
    %v402 = vmul.f32 %v358, %v354
    %v403 = vmul.f32 %v358, %v355
    %v404 = vmul.f32 %v359, %v352
    %v405 = vmul.f32 %v359, %v353
    %v406 = vmul.f32 %v359, %v354
    %v407 = vmul.f32 %v359, %v355
    %v408 = vadd.f32 %v332, %v400
    %v409 = vadd.f32 %v333, %v401
    %v410 = vadd.f32 %v334, %v402
    %v411 = vadd.f32 %v335, %v403
    %v412 = vadd.f32 %v336, %v404
    %v413 = vadd.f32 %v337, %v405
    %v414 = vadd.f32 %v338, %v406
    %v415 = vadd.f32 %v339, %v407
    %v416 = vmul.f32 %v380, %v347
    %v417 = vmul.f32 %v380, %v348
    %v418 = vmul.f32 %v380, %v349
    %v419 = vmul.f32 %v380, %v350
    %v420 = vmul.f32 %v381, %v347
    %v421 = vmul.f32 %v381, %v348
    %v422 = vmul.f32 %v381, %v349
    %v423 = vmul.f32 %v381, %v350
    %v424 = vadd.f32 %v408, %v416
    %v425 = vadd.f32 %v409, %v417
    %v426 = vadd.f32 %v410, %v418
    %v427 = vadd.f32 %v411, %v419
    %v428 = vadd.f32 %v412, %v420
    %v429 = vadd.f32 %v413, %v421
    %v430 = vadd.f32 %v414, %v422
    %v431 = vadd.f32 %v415, %v423
    %432 = vst [vmem:[#allocation10] sm:$0xff] %v392
    %433 = vst [vmem:[#allocation10 + $0x8] sm:$0xff] %v393
    %434 = vst [vmem:[#allocation10 + $0x10] sm:$0xff] %v394
    %435 = vst [vmem:[#allocation10 + $0x18] sm:$0xff] %v395
    %436 = vst [vmem:[#allocation10 + $0x20] sm:$0xff] %v396
    %437 = vst [vmem:[#allocation10 + $0x28] sm:$0xff] %v397
    %438 = vst [vmem:[#allocation10 + $0x30] sm:$0xff] %v398
    %439 = vst [vmem:[#allocation10 + $0x38] sm:$0xff] %v399
    %440 = vst [vmem:[#allocation11] sm:$0xff] %v424
    %441 = vst [vmem:[#allocation11 + $0x8] sm:$0xff] %v425
    %442 = vst [vmem:[#allocation11 + $0x10] sm:$0xff] %v426
    %443 = vst [vmem:[#allocation11 + $0x18] sm:$0xff] %v427
    %444 = vst [vmem:[#allocation11 + $0x20] sm:$0xff] %v428
    %445 = vst [vmem:[#allocation11 + $0x28] sm:$0xff] %v429
    %446 = vst [vmem:[#allocation11 + $0x30] sm:$0xff] %v430
    %447 = vst [vmem:[#allocation11 + $0x38] sm:$0xff] %v431
    // Predicated region
    $region34: #{tpu_custom_call.1} parent=1 // pred_check
      _
    $region35: #{tpu_custom_call.1} parent=1 // pred_check_branch
      %449 = sbr.rel (0) target = $region37
    $region36: #{tpu_custom_call.1} parent=1 // pred_region
      %451 = vsyncadd [#allocation4], 0
      %s452 = sshll.u32 [#allocation10], 4
      %s453 = int_to_ptr.vmem [resolvable:$true] %s452
      %s454 = sshll.u32 %s4, 4
      %s455 = int_to_ptr.hbm [resolvable:$true] %s454
      %460 = dma.vmem_to_hbm [thread:$0]  %s453, 1024, %s455, [#allocation4], 128, 128, 8
    $region37: #{tpu_custom_call.1} parent=1 // pred_fallthru
      _
    // Predicated region
    $region38: #{tpu_custom_call.1} parent=1 // pred_check
      _
    $region39: #{tpu_custom_call.1} parent=1 // pred_check_branch
      %462 = sbr.rel (0) target = $region41
    $region40: #{tpu_custom_call.1} parent=1 // pred_region
      %464 = vsyncadd [#allocation12], 0
      %s465 = sshll.u32 [#allocation11], 4
      %s466 = int_to_ptr.vmem [resolvable:$true] %s465
      %s467 = sshll.u32 %s5, 4
      %s468 = int_to_ptr.hbm [resolvable:$true] %s467
      %473 = dma.vmem_to_hbm [thread:$0]  %s466, 1024, %s468, [#allocation12], 128, 128, 8
    $region41: #{tpu_custom_call.1} parent=1 // pred_fallthru
      _
    // Predicated region
    $region42: #{tpu_custom_call.1} parent=1 // pred_check
      _
    $region43: #{tpu_custom_call.1} parent=1 // pred_check_branch
      %475 = sbr.rel (0) target = $region45
    $region44: #{tpu_custom_call.1} parent=1 // pred_region
      %477 = dma.done [#allocation4], 1024
    $region45: #{tpu_custom_call.1} parent=1 // pred_fallthru
      _
    // Predicated region
    $region46: #{tpu_custom_call.1} parent=1 // pred_check
      _
    $region47: #{tpu_custom_call.1} parent=1 // pred_check_branch
      %479 = sbr.rel (0) target = $region49
    $region48: #{tpu_custom_call.1} parent=1 // pred_region
      %481 = dma.done [#allocation12], 1024
    $region49: #{tpu_custom_call.1} parent=1 // pred_fallthru
      _
    %482 = vsyncpa [#allocation3], 1
    %483 = vsyncpa [#allocation6], 1
    %484 = vsyncpa [#allocation9], 1
    %485 = vsyncpa [#allocation4], 1
    %486 = vsyncpa [#allocation12], 1

</llo_original>
